<compile_context>
chip_gen: v5e
topology: v5e:2x2
jax: 0.10.0
libtpu: 0.0.40
codegen_flags: <defaults>
</compile_context>

<pallas_src>
import jax
import jax.numpy as jnp
from jax.experimental import pallas as pl
from jax.experimental.pallas import tpu as pltpu


# ------------------------------- kernels ------------------------------------

def _concat_kernel(t_ref, m_ref, o_ref):
    """out[:, :D] = temporal tile ; out[:, D:] = meta row repeated."""
    ts, d = t_ref.shape[1], t_ref.shape[2]
    e = m_ref.shape[2]
    meta_rows = jnp.broadcast_to(m_ref[0], (ts, e)).astype(o_ref.dtype)
    if d % 128 == 0:
        # Lane-aligned slab stores (unmasked vst on both halves).
        o_ref[0, :, :d] = t_ref[0].astype(o_ref.dtype)
        o_ref[0, :, d:] = meta_rows
    else:
        # D not lane aligned: assemble the row in-register, one store.
        o_ref[0] = jnp.concatenate(
            [t_ref[0].astype(o_ref.dtype), meta_rows], axis=-1)


def _linear_kernel(t_ref, w_ref, fb_ref, o_ref):
    """y = t @ W1_tile + fused_bias_row (meta + bias folded in the wrapper)."""
    y = jnp.dot(t_ref[0], w_ref[...], preferred_element_type=jnp.float32)
    o_ref[0] = (y + fb_ref[0]).astype(o_ref.dtype)


def _linear_acc_kernel(t_ref, w_ref, fb_ref, o_ref, acc_ref):
    """K-tiled variant: accumulate partials, finalize on the last K step."""
    k = pl.program_id(3)

    @pl.when(k == 0)
    def _():
        acc_ref[...] = jnp.zeros_like(acc_ref)

    acc_ref[...] += jnp.dot(t_ref[0], w_ref[...],
                            preferred_element_type=jnp.float32)

    @pl.when(k == pl.num_programs(3) - 1)
    def _():
        o_ref[0] = (acc_ref[...] + fb_ref[0]).astype(o_ref.dtype)


# --------------------------- tile selection ----------------------------------

def _sublane_align(*dtypes):
    """Minimum second-minor (sublane) alignment for the given dtypes."""
    worst = 8
    for dt in dtypes:
        isz = jnp.dtype(dt).itemsize
        worst = max(worst, {4: 8, 2: 16, 1: 32}.get(isz, 8))
    return worst


def _pick_seq_tile(S, bytes_per_row, *, align, target_bytes, cap):
    """Largest aligned seq tile whose working bytes stay under target."""
    if S <= align:
        return S                                   # full-extent block is legal
    ts = max(align, min(cap, int(target_bytes) // max(int(bytes_per_row), 1)))
    ts = (ts // align) * align
    max_ts = (S // align) * align                  # never exceed the array
    return max(align, min(ts, max_ts))


def _ensure_two_steps(B, S, ts, align):
    """v7x has 2 TensorCores: make sure the parallel grid has >= 2 steps."""
    while B * pl.cdiv(S, ts) < 2 and ts > align:
        ts = max(align, ((ts // 2) // align) * align)
    return ts


def _vmem_limit(est_bytes):
    # At least the v6e/v7x 32 MiB default (v5e's default is only 16 MiB), 2x
    # headroom over the estimate, capped at v7x's 64 MiB physical VMEM.
    return int(min(max(2 * est_bytes + (4 << 20), 32 << 20), 64 << 20))


# ------------------------------- wrappers ------------------------------------

def _concat_path(temporal, meta, block_s):
    B, S, D = temporal.shape
    E = meta.shape[-1]
    out_dtype = jnp.promote_types(temporal.dtype, meta.dtype)
    t_bytes = jnp.dtype(temporal.dtype).itemsize
    m_bytes = jnp.dtype(meta.dtype).itemsize
    o_bytes = jnp.dtype(out_dtype).itemsize
    align = _sublane_align(temporal.dtype, out_dtype)

    if block_s is None:
        row_bytes = D * t_bytes + (D + E) * o_bytes
        block_s = _pick_seq_tile(S, row_bytes, align=align,
                                 target_bytes=4 << 20, cap=4096)
        block_s = _ensure_two_steps(B, S, block_s, align)
    n_s = pl.cdiv(S, block_s)

    est = (2 * block_s * D * t_bytes            # temporal tile (double buf)
           + 2 * E * m_bytes                    # meta row
           + 2 * block_s * (D + E) * o_bytes)   # output tile

    return pl.pallas_call(
        _concat_kernel,
        out_shape=jax.ShapeDtypeStruct((B, S, D + E), out_dtype),
        grid=(B, n_s),
        in_specs=[
            pl.BlockSpec((1, block_s, D), lambda b, s: (b, s, 0)),
            pl.BlockSpec((1, 1, E), lambda b, s: (b, 0, 0)),
        ],
        out_specs=pl.BlockSpec((1, block_s, D + E), lambda b, s: (b, s, 0)),
        compiler_params=pltpu.CompilerParams(
            dimension_semantics=("parallel", "parallel"),
            vmem_limit_bytes=_vmem_limit(est)),
    )(temporal, meta)


def _linear_path(temporal, meta, weight, bias, compute_dtype,
                 block_s, block_n, block_k):
    B, S, D = temporal.shape
    E = meta.shape[-1]
    out_d = weight.shape[-1]
    out_dtype = temporal.dtype
    if bias is None:
        bias = jnp.zeros((out_d,), jnp.float32)

    # --- hoist the meta contribution into a per-batch (1, out) bias row ------
    w1 = weight[:D]                      # (D, out)  -> MXU
    w2 = weight[D:]                      # (E, out)  -> folded into the bias
    fb = (meta[:, 0, :].astype(jnp.float32) @ w2.astype(jnp.float32)
          + bias.astype(jnp.float32)).reshape(B, 1, out_d)

    if compute_dtype is not None:
        temporal = temporal.astype(compute_dtype)
        w1 = w1.astype(compute_dtype)

    in_bytes = jnp.dtype(temporal.dtype).itemsize
    w_bytes = jnp.dtype(w1.dtype).itemsize
    o_bytes = jnp.dtype(out_dtype).itemsize
    align = _sublane_align(temporal.dtype, out_dtype)

    # --- N (out_d) tiling -----------------------------------------------------
    if block_n is None:
        block_n = out_d if out_d <= 256 else 256
    block_n = min(block_n, out_d)
    n_n = pl.cdiv(out_d, block_n)

    # --- K (D) tiling: exact divisors only so padded lanes never enter the sum
    if block_k is None:
        block_k = D
        if D > 1024:
            for tk in (512, 256, 128):
                if D % tk == 0:
                    block_k = tk
                    break
    if D % block_k != 0:
        block_k = D
    n_k = D // block_k

    # --- S tiling from a VMEM byte budget --------------------------------------
    if block_s is None:
        row_bytes = block_k * in_bytes + 2 * block_n * o_bytes + block_n * 4
        block_s = _pick_seq_tile(S, row_bytes, align=align,
                                 target_bytes=2 << 20, cap=512)
        block_s = _ensure_two_steps(B, S, block_s, align)
    n_s = pl.cdiv(S, block_s)

    est = (2 * block_s * block_k * in_bytes     # temporal tile
           + 2 * block_k * block_n * w_bytes    # weight tile
           + 2 * block_n * 4                    # fused bias row
           + 2 * block_s * block_n * o_bytes    # output tile
           + block_s * block_n * 4)             # f32 accumulator scratch

    out_shape = jax.ShapeDtypeStruct((B, S, out_d), out_dtype)

    if n_k == 1:
        return pl.pallas_call(
            _linear_kernel,
            out_shape=out_shape,
            grid=(B, n_s, n_n),
            in_specs=[
                pl.BlockSpec((1, block_s, D), lambda b, s, n: (b, s, 0)),
                pl.BlockSpec((D, block_n), lambda b, s, n: (0, n)),
                pl.BlockSpec((1, 1, block_n), lambda b, s, n: (b, 0, n)),
            ],
            out_specs=pl.BlockSpec((1, block_s, block_n),
                                   lambda b, s, n: (b, s, n)),
            compiler_params=pltpu.CompilerParams(
                dimension_semantics=("parallel", "parallel", "parallel"),
                vmem_limit_bytes=_vmem_limit(est)),
        )(temporal, w1, fb)

    return pl.pallas_call(
        _linear_acc_kernel,
        out_shape=out_shape,
        grid=(B, n_s, n_n, n_k),
        in_specs=[
            pl.BlockSpec((1, block_s, block_k), lambda b, s, n, k: (b, s, k)),
            pl.BlockSpec((block_k, block_n), lambda b, s, n, k: (k, n)),
            pl.BlockSpec((1, 1, block_n), lambda b, s, n, k: (b, 0, n)),
        ],
        out_specs=pl.BlockSpec((1, block_s, block_n),
                               lambda b, s, n, k: (b, s, n)),
        scratch_shapes=[pltpu.VMEM((block_s, block_n), jnp.float32)],
        compiler_params=pltpu.CompilerParams(
            dimension_semantics=("parallel", "parallel", "parallel",
                                 "arbitrary"),
            vmem_limit_bytes=_vmem_limit(est)),
    )(temporal, w1, fb)


def concatenation_forward(temporal, meta, *, use_layer=False, weight=None,
                          bias=None, compute_dtype=None,
                          block_s=None, block_n=None, block_k=None):
    """Concatenation(cat_dim=2, repeat=True[, use_layer]) forward.

    temporal: (B, S, D); meta: (B, 1, E).
    weight: (D+E, out) -- PyTorch Linear weight transposed; bias: (out,).
    """
    if not use_layer:
        return _concat_path(temporal, meta, block_s)
    return _linear_path(temporal, meta, weight, bias, compute_dtype,
                        block_s, block_n, block_k)


def merging_model_forward(temporal, meta_vec, *, use_layer=False, weight=None,
                          bias=None, compute_dtype=None,
                          block_s=None, block_n=None, block_k=None):
    """MergingModel('Concat') forward: meta_vec (E,) repeated per batch."""
    B = temporal.shape[0]
    meta = jnp.broadcast_to(meta_vec.reshape(1, 1, -1),
                            (B, 1, meta_vec.shape[-1]))
    return concatenation_forward(temporal, meta, use_layer=use_layer,
                                 weight=weight, bias=bias,
                                 compute_dtype=compute_dtype,
                                 block_s=block_s, block_n=block_n,
                                 block_k=block_k)


# --------------------------- pure-JAX reference -------------------------------

def _ref(temporal, meta, *, use_layer, weight=None, bias=None):
    B, S, _ = temporal.shape
    meta_rep = jnp.broadcast_to(meta, (B, S, meta.shape[-1]))
    x = jnp.concatenate([temporal, meta_rep], axis=2)
    if use_layer:
        x = x @ weight + bias
    return x


if __name__ == "__main__":
    key = jax.random.PRNGKey(0)
    k1, k2, k3, k4, k5, k6 = jax.random.split(key, 6)

    # ---- case 1: pure concat, non-lane-aligned D (single fused store) -------
    B, S, D, E = 2, 8, 32, 32
    temporal = jax.random.normal(k1, (B, S, D), jnp.float32)
    meta_vec = jax.random.normal(k2, (E,), jnp.float32)
    meta = jnp.broadcast_to(meta_vec.reshape(1, 1, E), (B, 1, E))
    out1 = jax.block_until_ready(merging_model_forward(temporal, meta_vec))
    ref1 = _ref(temporal, meta, use_layer=False)
    assert out1.shape == (B, S, D + E)
    assert jnp.allclose(out1, ref1, atol=1e-6), "concat (unaligned D) mismatch"

    # ---- case 2: pure concat, lane-aligned D + ragged S (masked edge block) --
    B2, S2, D2, E2 = 2, 20, 128, 128
    t2 = jax.random.normal(k3, (B2, S2, D2), jnp.float32)
    mv2 = jax.random.normal(k4, (E2,), jnp.float32)
    m2 = jnp.broadcast_to(mv2.reshape(1, 1, E2), (B2, 1, E2))
    out2 = jax.block_until_ready(merging_model_forward(t2, mv2))
    ref2 = _ref(t2, m2, use_layer=False)
    assert out2.shape == (B2, S2, D2 + E2)
    assert jnp.allclose(out2, ref2, atol=1e-6), "concat (aligned D) mismatch"

    # ---- case 3: concat + Linear, small dims (single weight block) -----------
    out_d = 32
    bound = 1.0 / jnp.sqrt(D + E)
    w = jax.random.uniform(k5, (D + E, out_d), jnp.float32, -bound, bound)
    b = jax.random.uniform(k6, (out_d,), jnp.float32, -bound, bound)
    out3 = jax.block_until_ready(
        merging_model_forward(temporal, meta_vec, use_layer=True,
                              weight=w, bias=b))
    ref3 = _ref(temporal, meta, use_layer=True, weight=w, bias=b)
    assert out3.shape == (B, S, out_d)
    assert jnp.allclose(out3, ref3, atol=1e-2, rtol=1e-2), \
        "concat+linear mismatch"

    # ---- case 4: concat + Linear, N/K-tiled weight + ragged S ----------------
    D4, E4, out4 = 256, 64, 256
    t4 = jax.random.normal(k3, (B2, S2, D4), jnp.float32)
    mv4 = jax.random.normal(k4, (E4,), jnp.float32)
    m4 = jnp.broadcast_to(mv4.reshape(1, 1, E4), (B2, 1, E4))
    bound4 = 1.0 / jnp.sqrt(D4 + E4)
    w4 = jax.random.uniform(k5, (D4 + E4, out4), jnp.float32, -bound4, bound4)
    b4 = jax.random.uniform(k6, (out4,), jnp.float32, -bound4, bound4)
    out4a = jax.block_until_ready(
        merging_model_forward(t4, mv4, use_layer=True, weight=w4, bias=b4,
                              block_n=128, block_k=128))
    ref4 = _ref(t4, m4, use_layer=True, weight=w4, bias=b4)
    assert out4a.shape == (B2, S2, out4)
    assert jnp.allclose(out4a, ref4, atol=2e-2, rtol=2e-2), \
        "tiled concat+linear mismatch"

    # ---- case 5: bf16 MXU compute path (f32 accumulation, f32 output) --------
    out5 = jax.block_until_ready(
        merging_model_forward(t4, mv4, use_layer=True, weight=w4, bias=b4,
                              block_n=128, block_k=128,
                              compute_dtype=jnp.bfloat16))
    assert out5.shape == (B2, S2, out4)
    assert jnp.allclose(out5, ref4, atol=1e-1, rtol=1e-1), \
        "bf16 concat+linear mismatch"

    print("KERNEL_OK")
</pallas_src>

<mosaic_0001>
module attributes {stable_mosaic.version = 11 : i64} {
  func.func @_concat_kernel(%arg0: i32, %arg1: i32, %arg2: memref<1x8x32xf32, #tpu.memory_space<vmem>>, %arg3: memref<1x1x32xf32, #tpu.memory_space<vmem>>, %arg4: memref<1x8x64xf32, #tpu.memory_space<vmem>>) attributes {dimension_semantics = [#tpu.dimension_semantics<parallel>, #tpu.dimension_semantics<parallel>], iteration_bounds = array<i64: 2, 1>, scalar_prefetch = 0 : i64, scratch_operands = 0 : i64, tpu.core_type = #tpu.core_type<tc>, window_params = [{transform_indices = @transform_0, window_bounds = array<i64: 1, 8, 32>}, {transform_indices = @transform_1, window_bounds = array<i64: 1, 1, 32>}, {transform_indices = @transform_2, window_bounds = array<i64: 1, 8, 64>}]} {
    %c0 = arith.constant 0 : index
    %c0_0 = arith.constant 0 : index
    %c0_1 = arith.constant 0 : index
    %0 = vector.load %arg3[%c0, %c0_0, %c0_1] : memref<1x1x32xf32, #tpu.memory_space<vmem>>, vector<1x1x32xf32>
    %1 = vector.shape_cast %0 : vector<1x1x32xf32> to vector<1x32xf32>
    %2 = vector.shape_cast %1 : vector<1x32xf32> to vector<1x32xf32>
    %3 = vector.broadcast %2 : vector<1x32xf32> to vector<8x32xf32>
    %c0_2 = arith.constant 0 : index
    %c0_3 = arith.constant 0 : index
    %c0_4 = arith.constant 0 : index
    %4 = vector.load %arg2[%c0_2, %c0_3, %c0_4] : memref<1x8x32xf32, #tpu.memory_space<vmem>>, vector<1x8x32xf32>
    %5 = vector.shape_cast %4 : vector<1x8x32xf32> to vector<8x32xf32>
    %6 = tpu.concatenate %5, %3 in 1 : vector<8x32xf32>, vector<8x32xf32> -> vector<8x64xf32>
    %c0_5 = arith.constant 0 : index
    %c0_6 = arith.constant 0 : index
    %c0_7 = arith.constant 0 : index
    %7 = vector.load %arg4[%c0_5, %c0_6, %c0_7] : memref<1x8x64xf32, #tpu.memory_space<vmem>>, vector<1x8x64xf32>
    %8 = vector.shape_cast %7 : vector<1x8x64xf32> to vector<8x64xf32>
    %9 = vector.shape_cast %6 : vector<8x64xf32> to vector<1x8x64xf32>
    tpu.vector_store %arg4[%c0_5, %c0_6, %c0_7], %9 {strides = array<i32>} : memref<1x8x64xf32, #tpu.memory_space<vmem>>, vector<1x8x64xf32>,
    return
  }
  func.func @transform_0(%arg0: i32, %arg1: i32) -> (i32, i32, i32) {
    %c0_i32 = arith.constant 0 : i32
    %c0_i32_0 = arith.constant 0 : i32
    return %arg0, %arg1, %c0_i32 : i32, i32, i32
  }
  func.func @transform_1(%arg0: i32, %arg1: i32) -> (i32, i32, i32) {
    %c0_i32 = arith.constant 0 : i32
    %c0_i32_0 = arith.constant 0 : i32
    %c0_i32_1 = arith.constant 0 : i32
    return %arg0, %c0_i32, %c0_i32_0 : i32, i32, i32
  }
  func.func @transform_2(%arg0: i32, %arg1: i32) -> (i32, i32, i32) {
    %c0_i32 = arith.constant 0 : i32
    %c0_i32_0 = arith.constant 0 : i32
    return %arg0, %arg1, %c0_i32 : i32, i32, i32
  }
}

</mosaic_0001>

<llo_original>
// kernel: tpu_custom_call.1
$region0: #{tpu_custom_call.1}
  #allocation0 [shape = 'u32[]', space=smem, size = 0x4, offset = 0x4, fixed_abs, tag = 'smem constant byte address 0x4 - core index']
  #allocation1 [shape = 'u32[72,128]{1,0:T(1,128)}', space=vmem, size = 0x9000, scoped, tag = 'internal scratch']
  %s0 = inlined_call_operand.hbm [shape: f32[2,8,32], index: 0, kind: input, shape index: {}]
  %s1 = inlined_call_operand.hbm [shape: f32[2,1,32], index: 1, kind: input, shape index: {}]
  %s2 = inlined_call_operand.hbm [shape: f32[2,8,64], index: 2, kind: output, shape index: {}]
  %s3 = sld [smem:[#allocation0]]
  $region49: #{tpu_custom_call.1} parent=0
    _
  %s5 = ssub.s32 1, %s3
  %s6 = scalar_select 0, %s5, %s3
  $region1: #{tpu_custom_call.1} parent=0
    #allocation2 [shape = 'u8[8192]{0}', space=vmem, size = 0x2000, scoped, tag = 'input window, operand 0']
    #allocation3 [shape = 's32[2]{0}', space=sflag, size = 0x8, scoped, tag = 'scoped memory for tpu_custom_call.1']
    #allocation4 [shape = 's32[2]{0}', space=sflag, size = 0x8, scoped, tag = 'scoped memory for tpu_custom_call.1']
    #allocation5 [shape = 'u8[1024]{0}', space=vmem, size = 0x400, scoped, tag = 'input window, operand 1']
    #allocation6 [shape = 's32[2]{0}', space=sflag, size = 0x8, scoped, tag = 'scoped memory for tpu_custom_call.1']
    #allocation7 [shape = 'u8[8192]{0}', space=vmem, size = 0x2000, scoped, tag = 'output window, operand 0']
    %7 = vsyncpa [#allocation3], 0
    %s8 = scalar_lea.sflag [#allocation3], 1
    %9 = vsyncpa %s8, 0
    %10 = vsyncpa [#allocation6], 0
    %s11 = scalar_lea.sflag [#allocation6], 1
    %12 = vsyncpa %s11, 0
    %13 = vsyncpa [#allocation4], 0
    %s14 = scalar_lea.sflag [#allocation4], 1
    %15 = vsyncpa %s14, 0
    loop: start=0, step=1, limit=4
    $region2: #{tpu_custom_call.1} parent=1 // loop_pre_header
      _
    $region3: #{tpu_custom_call.1} parent=1 // loop_header
      %s17 = sphi 0, %s21
      %p18 = scmp.ge.s32.totalorder %s17, 4
      %s24 = sphi 0, %s36
      %s25 = sphi 0, %s32
      %s26 = sphi 0, %s24
      %s27 = sphi 0, %s25
      %s28 = sphi 0, %s26
      %s29 = sphi 0, %s27
      %s41 = sphi 0, %s43
      %s44 = sphi 0, %s41
      %s45 = sphi 0, %s44
      %s61 = sphi 0, %s45
      %s67 = sphi 0, %s69
      %s70 = sphi 0, %s67
      %s71 = sphi 0, %s70
      %s87 = sphi 0, %s71
      %s95 = sphi 0, %s97
      %s98 = sphi 0, %s95
      %s99 = sphi 0, %s98
      %s115 = sphi 0, %s99
    $region4: #{tpu_custom_call.1} parent=1 // loop_header_branch
      %20 = sbr.rel (%p18) target = $region8
    $region5: #{tpu_custom_call.1} parent=1 // loop_body
      %s22 = ssub.s32 %s17, 1
      %s23 = ssub.s32 %s17, 2
      %s30 = sadd.s32 1, %s25
      %p31 = scmp.ge.s32.totalorder %s30, 1
      %s32 = scalar_select %p31, 0, %s30
      %s33 = sadd.s32 1, %s24
      %s34 = scalar_select %p31, %s33, %s24
      %p35 = scmp.ge.s32.totalorder %s34, 2
      %s36 = scalar_select %p35, 0, %s34
      %s37 = ssub.s32 %s24, %s36
      %s38 = ssub.s32 %s25, %s32
      %s39 = sor.u32 %s37, %s38
      %p40 = scmp.eq.s32.totalorder %s39, 0
      %s42 = sadd.s32 %s41, 1
      %s43 = scalar_select %p40, %s41, %s42
      %p46 = pneg %p40
      %p47 = scmp.eq.s32.totalorder %s17, 1
      %p48 = por %p46, %p47
      %p49 = scmp.ne.s32.totalorder %s41, %s44
      %p50 = scmp.eq.s32.totalorder %s17, 0
      %p51 = por %p49, %p50
      %p52 = scmp.ne.s32.totalorder %s41, %s44
      %p53 = scmp.eq.s32.totalorder %s22, 1
      %p54 = por %p52, %p53
      %p55 = scmp.ne.s32.totalorder %s44, %s45
      %p56 = scmp.eq.s32.totalorder %s22, 0
      %p57 = por %p55, %p56
      %p58 = scmp.ne.s32.totalorder %s44, %s45
      %p59 = scmp.eq.s32.totalorder %s23, 1
      %p60 = por %p58, %p59
      %p62 = scmp.ne.s32.totalorder %s45, %s61
      %p63 = scmp.eq.s32.totalorder %s23, 0
      %p64 = por %p62, %p63
      %s65 = ssub.s32 %s24, %s36
      %p66 = scmp.eq.s32.totalorder %s65, 0
      %s68 = sadd.s32 %s67, 1
      %s69 = scalar_select %p66, %s67, %s68
      %p72 = pneg %p66
      %p73 = scmp.eq.s32.totalorder %s17, 1
      %p74 = por %p72, %p73
      %p75 = scmp.ne.s32.totalorder %s67, %s70
      %p76 = scmp.eq.s32.totalorder %s17, 0
      %p77 = por %p75, %p76
      %p78 = scmp.ne.s32.totalorder %s67, %s70
      %p79 = scmp.eq.s32.totalorder %s22, 1
      %p80 = por %p78, %p79
      %p81 = scmp.ne.s32.totalorder %s70, %s71
      %p82 = scmp.eq.s32.totalorder %s22, 0
      %p83 = por %p81, %p82
      %p84 = scmp.ne.s32.totalorder %s70, %s71
      %p85 = scmp.eq.s32.totalorder %s23, 1
      %p86 = por %p84, %p85
      %p88 = scmp.ne.s32.totalorder %s71, %s87
      %p89 = scmp.eq.s32.totalorder %s23, 0
      %p90 = por %p88, %p89
      %s91 = ssub.s32 %s24, %s36
      %s92 = ssub.s32 %s25, %s32
      %s93 = sor.u32 %s91, %s92
      %p94 = scmp.eq.s32.totalorder %s93, 0
      %s96 = sadd.s32 %s95, 1
      %s97 = scalar_select %p94, %s95, %s96
      %p100 = pneg %p94
      %p101 = scmp.eq.s32.totalorder %s17, 1
      %p102 = por %p100, %p101
      %p103 = scmp.ne.s32.totalorder %s95, %s98
      %p104 = scmp.eq.s32.totalorder %s17, 0
      %p105 = por %p103, %p104
      %p106 = scmp.ne.s32.totalorder %s95, %s98
      %p107 = scmp.eq.s32.totalorder %s22, 1
      %p108 = por %p106, %p107
      %p109 = scmp.ne.s32.totalorder %s98, %s99
      %p110 = scmp.eq.s32.totalorder %s22, 0
      %p111 = por %p109, %p110
      %p112 = scmp.ne.s32.totalorder %s98, %s99
      %p113 = scmp.eq.s32.totalorder %s23, 1
      %p114 = por %p112, %p113
      %p116 = scmp.ne.s32.totalorder %s99, %s115
      %p117 = scmp.eq.s32.totalorder %s23, 0
      %p118 = por %p116, %p117
      %p119 = scmp.le.s32.totalorder 1, %s17
      %p120 = scmp.lt.s32.totalorder %s17, 3
      %p121 = pnand %p119, %p120
      %p122 = pneg %p121
      // Predicated region
      $region9: #{tpu_custom_call.1} parent=5 // pred_check
        _
      $region10: #{tpu_custom_call.1} parent=5 // pred_check_branch
        %124 = sbr.rel (%p121) target = $region12
      $region11: #{tpu_custom_call.1} parent=5 // pred_region
        %s125 = ssub.s32 %s17, 1
      $region12: #{tpu_custom_call.1} parent=5 // pred_fallthru
        _
      %p126 = scmp.lt.s32.totalorder %s17, 2
      // Predicated region
      $region13: #{tpu_custom_call.1} parent=5 // pred_check
        %p127 = pneg %p126
      $region14: #{tpu_custom_call.1} parent=5 // pred_check_branch
        %129 = sbr.rel (%p127) target = $region16
      $region15: #{tpu_custom_call.1} parent=5 // pred_region
        // Predicated region
        $region17: #{tpu_custom_call.1} parent=15 // pred_check
          %p130 = pneg %p51
        $region18: #{tpu_custom_call.1} parent=15 // pred_check_branch
          %132 = sbr.rel (%p130) target = $region20
        $region19: #{tpu_custom_call.1} parent=15 // pred_region
          %s133 = sand.u32 %s41, 1
          %s134 = scalar_lea.sflag [#allocation3], %s133
          %s135 = sand.u32 %s41, 1
          %s136 = smul.addr %s135, 8
          %s137 = scalar_lea.vmem [#allocation2], %s136
          %139 = vsyncadd %s134, 0
          %s140 = sadd.s32 %s25, %s24
          %s141 = smul.addr %s140, 8
          %s142 = scalar_lea.hbm %s0, %s141
          %s144 = sshll.u32 %s142, 4
          %s145 = int_to_ptr.hbm [resolvable:$true] %s144
          %s146 = sshll.u32 %s137, 4
          %s147 = int_to_ptr.vmem [resolvable:$true] %s146
          %149 = dma.hbm_to_vmem [thread:$0]  %s145, 128, %s147, %s134
        $region20: #{tpu_custom_call.1} parent=15 // pred_fallthru
          _
        // Predicated region
        $region21: #{tpu_custom_call.1} parent=15 // pred_check
          %p150 = pneg %p77
        $region22: #{tpu_custom_call.1} parent=15 // pred_check_branch
          %152 = sbr.rel (%p150) target = $region24
        $region23: #{tpu_custom_call.1} parent=15 // pred_region
          %s153 = sand.u32 %s67, 1
          %s154 = scalar_lea.sflag [#allocation6], %s153
          %s155 = sand.u32 %s67, 1
          %s156 = scalar_lea.vmem [#allocation5], %s155
          %158 = vsyncadd %s154, 0
          %s159 = scalar_lea.hbm %s1, %s24
          %s161 = sshll.u32 %s159, 4
          %s162 = int_to_ptr.hbm [resolvable:$true] %s161
          %s163 = sshll.u32 %s156, 4
          %s164 = int_to_ptr.vmem [resolvable:$true] %s163
          %166 = dma.hbm_to_vmem [thread:$0]  %s162, 16, %s164, %s154
        $region24: #{tpu_custom_call.1} parent=15 // pred_fallthru
          _
      $region16: #{tpu_custom_call.1} parent=5 // pred_fallthru
        _
      %p167 = scmp.le.s32.totalorder 1, %s17
      %p168 = scmp.lt.s32.totalorder %s17, 3
      %p169 = pnand %p167, %p168
      %p170 = pneg %p169
      // Predicated region
      $region25: #{tpu_custom_call.1} parent=5 // pred_check
        _
      $region26: #{tpu_custom_call.1} parent=5 // pred_check_branch
        %172 = sbr.rel (%p169) target = $region28
      $region27: #{tpu_custom_call.1} parent=5 // pred_region
        %s173 = ssub.s32 %s17, 1
        %s174 = sand.u32 %s44, 1
        %s175 = scalar_lea.sflag [#allocation3], %s174
        %s176 = sand.u32 %s44, 1
        %s177 = smul.addr %s176, 8
        %s178 = scalar_lea.vmem [#allocation2], %s177
        // Predicated region
        $region29: #{tpu_custom_call.1} parent=27 // pred_check
          %p179 = pneg %p57
        $region30: #{tpu_custom_call.1} parent=27 // pred_check_branch
          %181 = sbr.rel (%p179) target = $region32
        $region31: #{tpu_custom_call.1} parent=27 // pred_region
          %183 = dma.done %s175, 128
        $region32: #{tpu_custom_call.1} parent=27 // pred_fallthru
          _
        %s184 = sand.u32 %s70, 1
        %s185 = scalar_lea.sflag [#allocation6], %s184
        %s186 = sand.u32 %s70, 1
        %s187 = scalar_lea.vmem [#allocation5], %s186
        // Predicated region
        $region33: #{tpu_custom_call.1} parent=27 // pred_check
          %p188 = pneg %p83
        $region34: #{tpu_custom_call.1} parent=27 // pred_check_branch
          %190 = sbr.rel (%p188) target = $region36
        $region35: #{tpu_custom_call.1} parent=27 // pred_region
          %192 = dma.done %s185, 16
        $region36: #{tpu_custom_call.1} parent=27 // pred_fallthru
          _
        %s193 = sand.u32 %s44, 1
        %s194 = scalar_lea.sflag [#allocation3], %s193
        %s195 = sand.u32 %s44, 1
        %s196 = smul.addr %s195, 8
        %s197 = scalar_lea.vmem [#allocation2], %s196
        %p198 = pneg %p57
        %p199 = pneg %p54
        %s200 = sand.u32 %s70, 1
        %s201 = scalar_lea.sflag [#allocation6], %s200
        %s202 = sand.u32 %s70, 1
        %s203 = scalar_lea.vmem [#allocation5], %s202
        %p204 = pneg %p83
        %p205 = pneg %p80
        %p206 = pneg %p111
        %p207 = pneg %p108
        %s208 = sand.u32 %s98, 1
        %s209 = scalar_lea.sflag [#allocation4], %s208
        %s210 = sand.u32 %s98, 1
        %s211 = smul.addr %s210, 8
        %s212 = scalar_lea.vmem [#allocation7], %s211
        %v213 = vld [vmem:[%s187] sm:$0x1]
        %v215 = vperm.slane %v213, 0
        %v216 = vld [vmem:[%s178] sm:$0xff]
        %217 = vrot.lane.b32.xlu0 %v215, 32
        %v218 = vpop.permute.xlu0 %217
        %vm220 = vcmask 261120
        %v221 = vsel %vm220, %v216, %v218
        %vm222 = vcmask 523264
        %223 = vst.msk [vmem:[%s212] sm:$0xff] %vm222, %v221
        %s224 = sand.u32 %s98, 1
        %s225 = scalar_lea.sflag [#allocation4], %s224
        %s226 = sand.u32 %s98, 1
        %s227 = smul.addr %s226, 8
        %s228 = scalar_lea.vmem [#allocation7], %s227
        // Predicated region
        $region37: #{tpu_custom_call.1} parent=27 // pred_check
          %p229 = pneg %p108
        $region38: #{tpu_custom_call.1} parent=27 // pred_check_branch
          %231 = sbr.rel (%p229) target = $region40
        $region39: #{tpu_custom_call.1} parent=27 // pred_region
          %233 = vsyncadd %s225, 0
          %s234 = sadd.s32 %s27, %s26
          %s235 = smul.addr %s234, 8
          %s236 = scalar_lea.hbm %s2, %s235
          %s238 = sshll.u32 %s228, 4
          %s239 = int_to_ptr.vmem [resolvable:$true] %s238
          %s240 = sshll.u32 %s236, 4
          %s241 = int_to_ptr.hbm [resolvable:$true] %s240
          %243 = dma.vmem_to_hbm [thread:$0]  %s239, 128, %s241, %s225
        $region40: #{tpu_custom_call.1} parent=27 // pred_fallthru
          _
      $region28: #{tpu_custom_call.1} parent=5 // pred_fallthru
        _
      %p244 = scmp.le.s32.totalorder 2, %s17
      // Predicated region
      $region41: #{tpu_custom_call.1} parent=5 // pred_check
        %p245 = pneg %p244
      $region42: #{tpu_custom_call.1} parent=5 // pred_check_branch
        %247 = sbr.rel (%p245) target = $region44
      $region43: #{tpu_custom_call.1} parent=5 // pred_region
        %s248 = ssub.s32 %s17, 2
        // Predicated region
        $region45: #{tpu_custom_call.1} parent=43 // pred_check
          %p249 = pneg %p114
        $region46: #{tpu_custom_call.1} parent=43 // pred_check_branch
          %251 = sbr.rel (%p249) target = $region48
        $region47: #{tpu_custom_call.1} parent=43 // pred_region
          %s252 = sand.u32 %s99, 1
          %s253 = scalar_lea.sflag [#allocation4], %s252
          %s254 = sand.u32 %s99, 1
          %s255 = smul.addr %s254, 8
          %s256 = scalar_lea.vmem [#allocation7], %s255
          %258 = dma.done %s253, 128
        $region48: #{tpu_custom_call.1} parent=43 // pred_fallthru
          _
      $region44: #{tpu_custom_call.1} parent=5 // pred_fallthru
        _
    $region6: #{tpu_custom_call.1} parent=1 // loop_footer
      %s21 = sadd.s32 1, %s17
    $region7: #{tpu_custom_call.1} parent=1 // loop_footer_branch
      %16 = sbr.rel target = $region3
    $region8: #{tpu_custom_call.1} parent=1 // loop_exit
      _
    %259 = vsyncpa [#allocation3], 1
    %s260 = scalar_lea.sflag [#allocation3], 1
    %261 = vsyncpa %s260, 1
    %262 = vsyncpa [#allocation6], 1
    %s263 = scalar_lea.sflag [#allocation6], 1
    %264 = vsyncpa %s263, 1
    %265 = vsyncpa [#allocation4], 1
    %s266 = scalar_lea.sflag [#allocation4], 1
    %267 = vsyncpa %s266, 1

</llo_original>
